<compile_context>
chip_gen: v5e
topology: v5e:2x2
jax: 0.10.0
libtpu: 0.0.40
codegen_flags: <defaults>
</compile_context>

<pallas_src>
import math

import jax
import jax.numpy as jnp
from jax.experimental import pallas as pl
from jax.experimental.pallas import tpu as pltpu


def pos_enc_kernel(x_ref, pe_ref, o_ref):
    # x_ref, pe_ref, o_ref all have identical (tS, width) tile shapes:
    # plain VPU add over the whole VMEM tile, no broadcast materialized.
    o_ref[...] = (x_ref[...] + pe_ref[...]).astype(o_ref.dtype)


def make_positional_encoding(max_len, d_model):
    # Matches the torch buffer construction exactly (even d_model):
    #   pe[:, 0::2] = sin(position * div_term); pe[:, 1::2] = cos(...)
    position = jnp.arange(max_len, dtype=jnp.float32)[:, None]
    div_term = jnp.exp(jnp.arange(0, d_model, 2, dtype=jnp.float32)
                       * (-math.log(10000.0) / d_model))
    angles = position * div_term                                  # (L, D/2)
    pe = jnp.stack([jnp.sin(angles), jnp.cos(angles)], axis=-1)   # interleave
    return pe.reshape(max_len, d_model).astype(jnp.float32)


def positional_encoding_forward(x, pe_buffer):
    """x: (B, S, D); pe_buffer: (max_len, D) (the registered buffer)."""
    B, S, D = x.shape
    pe_slice = pe_buffer[:S].astype(x.dtype)          # == self.pe[:, :seq_len, :]

    # --- lane-dense folding: make the last dim a multiple of 128 -------------
    LANE = 128
    fold = 1
    if D % LANE != 0:
        cand = LANE // math.gcd(D, LANE)
        if S % cand == 0:
            fold = cand
    rows = S // fold
    width = D * fold
    x_r = x.reshape(B, rows, width)
    pe_r = pe_slice.reshape(rows, width)

    # --- tile size: largest multiple-of-8 row tile within a ~2 MiB budget ----
    # (2-deep pipeline on x in + out + resident pe stays well under the
    #  16 MiB scoped-VMEM default of v5e and the 32 MiB of v6e/v7x.)
    itemsize = x.dtype.itemsize
    target_tile_bytes = 2 * 1024 * 1024
    if rows <= 8:
        tS = rows                                      # full dim satisfies (8,128) rule
    else:
        tS = min(rows, max(8, (target_tile_bytes // (width * itemsize)) // 8 * 8))
    num_row_tiles = pl.cdiv(rows, tS)

    # grid = (row tiles, batch); batch is innermost so the pe block index is
    # constant across consecutive steps -> pe tile stays resident in VMEM.
    grid = (num_row_tiles, B)

    out_r = pl.pallas_call(
        pos_enc_kernel,
        out_shape=jax.ShapeDtypeStruct((B, rows, width), x.dtype),
        grid=grid,
        in_specs=[
            # x: batch dim squeezed (block dim None) -> kernel sees (tS, width)
            pl.BlockSpec((None, tS, width), lambda t, b: (b, t, 0)),
            # pe: index_map ignores the batch grid index
            pl.BlockSpec((tS, width), lambda t, b: (t, 0)),
        ],
        out_specs=pl.BlockSpec((None, tS, width), lambda t, b: (b, t, 0)),
        input_output_aliases={0: 0},   # out aliases x (same shape/dtype)
        compiler_params=pltpu.CompilerParams(
            dimension_semantics=("parallel", "parallel")),
    )(x_r, pe_r)

    return out_r.reshape(B, S, D)


if __name__ == "__main__":
    B, S, D = 2, 8, 64          # batch, seq_len, d_model
    MAX_LEN = 500               # module default max_len

    key = jax.random.PRNGKey(0)
    x = jax.random.normal(key, (B, S, D), dtype=jnp.float32)
    pe = make_positional_encoding(MAX_LEN, D)

    out = jax.block_until_ready(positional_encoding_forward(x, pe))

    # Pure-JAX reference of the module forward.
    ref = x + pe[None, :S, :]
    assert out.shape == (B, S, D)
    assert bool(jnp.all(jnp.isfinite(out)))
    assert bool(jnp.allclose(out, ref, atol=1e-6, rtol=1e-6))

    print("KERNEL_OK")
</pallas_src>

<mosaic_0001>
module attributes {stable_mosaic.version = 11 : i64} {
  func.func @pos_enc_kernel(%arg0: i32, %arg1: i32, %arg2: memref<1x4x128xf32, #tpu.memory_space<vmem>>, %arg3: memref<4x128xf32, #tpu.memory_space<vmem>>, %arg4: memref<1x4x128xf32, #tpu.memory_space<vmem>>) attributes {dimension_semantics = [#tpu.dimension_semantics<parallel>, #tpu.dimension_semantics<parallel>], iteration_bounds = array<i64: 1, 2>, scalar_prefetch = 0 : i64, scratch_operands = 0 : i64, tpu.core_type = #tpu.core_type<tc>, window_params = [{transform_indices = @transform_0, window_bounds = array<i64: 1, 4, 128>}, {transform_indices = @transform_1, window_bounds = array<i64: 4, 128>}, {transform_indices = @transform_2, window_bounds = array<i64: 1, 4, 128>}]} {
    %c0 = arith.constant 0 : index
    %c0_0 = arith.constant 0 : index
    %c0_1 = arith.constant 0 : index
    %0 = vector.load %arg2[%c0, %c0_0, %c0_1] : memref<1x4x128xf32, #tpu.memory_space<vmem>>, vector<1x4x128xf32>
    %1 = vector.shape_cast %0 : vector<1x4x128xf32> to vector<4x128xf32>
    %c0_2 = arith.constant 0 : index
    %c0_3 = arith.constant 0 : index
    %2 = vector.load %arg3[%c0_2, %c0_3] : memref<4x128xf32, #tpu.memory_space<vmem>>, vector<4x128xf32>
    %3 = arith.addf %1, %2 : vector<4x128xf32>
    %c0_4 = arith.constant 0 : index
    %c0_5 = arith.constant 0 : index
    %c0_6 = arith.constant 0 : index
    %4 = vector.load %arg4[%c0_4, %c0_5, %c0_6] : memref<1x4x128xf32, #tpu.memory_space<vmem>>, vector<1x4x128xf32>
    %5 = vector.shape_cast %4 : vector<1x4x128xf32> to vector<4x128xf32>
    %6 = vector.shape_cast %3 : vector<4x128xf32> to vector<1x4x128xf32>
    tpu.vector_store %arg4[%c0_4, %c0_5, %c0_6], %6 {strides = array<i32>} : memref<1x4x128xf32, #tpu.memory_space<vmem>>, vector<1x4x128xf32>,
    return
  }
  func.func @transform_0(%arg0: i32, %arg1: i32) -> (i32, i32, i32) {
    %c0_i32 = arith.constant 0 : i32
    %c0_i32_0 = arith.constant 0 : i32
    return %arg1, %arg0, %c0_i32 : i32, i32, i32
  }
  func.func @transform_1(%arg0: i32, %arg1: i32) -> (i32, i32) {
    %c0_i32 = arith.constant 0 : i32
    %c0_i32_0 = arith.constant 0 : i32
    return %arg0, %c0_i32 : i32, i32
  }
  func.func @transform_2(%arg0: i32, %arg1: i32) -> (i32, i32, i32) {
    %c0_i32 = arith.constant 0 : i32
    %c0_i32_0 = arith.constant 0 : i32
    return %arg1, %arg0, %c0_i32 : i32, i32, i32
  }
}

</mosaic_0001>

<llo_original>
// kernel: tpu_custom_call.1
$region0: #{tpu_custom_call.1}
  #allocation0 [shape = 'u32[]', space=smem, size = 0x4, offset = 0x4, fixed_abs, tag = 'smem constant byte address 0x4 - core index']
  #allocation1 [shape = 'u32[72,128]{1,0:T(1,128)}', space=vmem, size = 0x9000, scoped, tag = 'internal scratch']
  %s0 = inlined_call_operand.hbm [shape: f32[2,4,128], index: 0, kind: input, shape index: {}, may-alias: {0,2}]
  %s1 = inlined_call_operand.vmem [shape: f32[4,128], index: 1, kind: input, shape index: {}]
  %s2 = inlined_call_operand.hbm [shape: f32[2,4,128], index: 2, kind: output, shape index: {}, may-alias: {0,2}]
  %s3 = sld [smem:[#allocation0]]
  $region45: #{tpu_custom_call.1} parent=0
    _
  %s5 = ssub.s32 1, %s3
  %s6 = scalar_select 0, %s5, %s3
  $region1: #{tpu_custom_call.1} parent=0
    #allocation2 [shape = 'u8[4096]{0}', space=vmem, size = 0x1000, scoped, tag = 'input window, operand 0']
    #allocation3 [shape = 's32[2]{0}', space=sflag, size = 0x8, scoped, tag = 'scoped memory for tpu_custom_call.1']
    #allocation4 [shape = 's32[2]{0}', space=sflag, size = 0x8, scoped, tag = 'scoped memory for tpu_custom_call.1']
    #allocation5 [shape = 'u8[4096]{0}', space=vmem, size = 0x1000, scoped, tag = 'output window, operand 0']
    %7 = vsyncpa [#allocation3], 0
    %s8 = scalar_lea.sflag [#allocation3], 1
    %9 = vsyncpa %s8, 0
    %10 = vsyncpa [#allocation4], 0
    %s11 = scalar_lea.sflag [#allocation4], 1
    %12 = vsyncpa %s11, 0
    loop: start=0, step=1, limit=4
    $region2: #{tpu_custom_call.1} parent=1 // loop_pre_header
      _
    $region3: #{tpu_custom_call.1} parent=1 // loop_header
      %s14 = sphi 0, %s18
      %p15 = scmp.ge.s32.totalorder %s14, 4
      %s21 = sphi 0, %s33
      %s22 = sphi 0, %s29
      %s23 = sphi 0, %s21
      %s24 = sphi 0, %s22
      %s25 = sphi 0, %s23
      %s26 = sphi 0, %s24
      %s38 = sphi 0, %s40
      %s41 = sphi 0, %s38
      %s42 = sphi 0, %s41
      %s58 = sphi 0, %s42
      %s64 = sphi 0, %s66
      %s67 = sphi 0, %s64
      %s68 = sphi 0, %s67
      %s84 = sphi 0, %s68
      %s92 = sphi 0, %s94
      %s95 = sphi 0, %s92
      %s96 = sphi 0, %s95
      %s112 = sphi 0, %s96
    $region4: #{tpu_custom_call.1} parent=1 // loop_header_branch
      %17 = sbr.rel (%p15) target = $region8
    $region5: #{tpu_custom_call.1} parent=1 // loop_body
      %s19 = ssub.s32 %s14, 1
      %s20 = ssub.s32 %s14, 2
      %s27 = sadd.s32 1, %s22
      %p28 = scmp.ge.s32.totalorder %s27, 2
      %s29 = scalar_select %p28, 0, %s27
      %s30 = sadd.s32 1, %s21
      %s31 = scalar_select %p28, %s30, %s21
      %p32 = scmp.ge.s32.totalorder %s31, 1
      %s33 = scalar_select %p32, 0, %s31
      %s34 = ssub.s32 %s22, %s29
      %s35 = ssub.s32 %s21, %s33
      %s36 = sor.u32 %s34, %s35
      %p37 = scmp.eq.s32.totalorder %s36, 0
      %s39 = sadd.s32 %s38, 1
      %s40 = scalar_select %p37, %s38, %s39
      %p43 = pneg %p37
      %p44 = scmp.eq.s32.totalorder %s14, 1
      %p45 = por %p43, %p44
      %p46 = scmp.ne.s32.totalorder %s38, %s41
      %p47 = scmp.eq.s32.totalorder %s14, 0
      %p48 = por %p46, %p47
      %p49 = scmp.ne.s32.totalorder %s38, %s41
      %p50 = scmp.eq.s32.totalorder %s19, 1
      %p51 = por %p49, %p50
      %p52 = scmp.ne.s32.totalorder %s41, %s42
      %p53 = scmp.eq.s32.totalorder %s19, 0
      %p54 = por %p52, %p53
      %p55 = scmp.ne.s32.totalorder %s41, %s42
      %p56 = scmp.eq.s32.totalorder %s20, 1
      %p57 = por %p55, %p56
      %p59 = scmp.ne.s32.totalorder %s42, %s58
      %p60 = scmp.eq.s32.totalorder %s20, 0
      %p61 = por %p59, %p60
      %s62 = ssub.s32 %s21, %s33
      %p63 = scmp.eq.s32.totalorder %s62, 0
      %s65 = sadd.s32 %s64, 1
      %s66 = scalar_select %p63, %s64, %s65
      %p69 = pneg %p63
      %p70 = scmp.eq.s32.totalorder %s14, 1
      %p71 = por %p69, %p70
      %p72 = scmp.ne.s32.totalorder %s64, %s67
      %p73 = scmp.eq.s32.totalorder %s14, 0
      %p74 = por %p72, %p73
      %p75 = scmp.ne.s32.totalorder %s64, %s67
      %p76 = scmp.eq.s32.totalorder %s19, 1
      %p77 = por %p75, %p76
      %p78 = scmp.ne.s32.totalorder %s67, %s68
      %p79 = scmp.eq.s32.totalorder %s19, 0
      %p80 = por %p78, %p79
      %p81 = scmp.ne.s32.totalorder %s67, %s68
      %p82 = scmp.eq.s32.totalorder %s20, 1
      %p83 = por %p81, %p82
      %p85 = scmp.ne.s32.totalorder %s68, %s84
      %p86 = scmp.eq.s32.totalorder %s20, 0
      %p87 = por %p85, %p86
      %s88 = ssub.s32 %s22, %s29
      %s89 = ssub.s32 %s21, %s33
      %s90 = sor.u32 %s88, %s89
      %p91 = scmp.eq.s32.totalorder %s90, 0
      %s93 = sadd.s32 %s92, 1
      %s94 = scalar_select %p91, %s92, %s93
      %p97 = pneg %p91
      %p98 = scmp.eq.s32.totalorder %s14, 1
      %p99 = por %p97, %p98
      %p100 = scmp.ne.s32.totalorder %s92, %s95
      %p101 = scmp.eq.s32.totalorder %s14, 0
      %p102 = por %p100, %p101
      %p103 = scmp.ne.s32.totalorder %s92, %s95
      %p104 = scmp.eq.s32.totalorder %s19, 1
      %p105 = por %p103, %p104
      %p106 = scmp.ne.s32.totalorder %s95, %s96
      %p107 = scmp.eq.s32.totalorder %s19, 0
      %p108 = por %p106, %p107
      %p109 = scmp.ne.s32.totalorder %s95, %s96
      %p110 = scmp.eq.s32.totalorder %s20, 1
      %p111 = por %p109, %p110
      %p113 = scmp.ne.s32.totalorder %s96, %s112
      %p114 = scmp.eq.s32.totalorder %s20, 0
      %p115 = por %p113, %p114
      %p116 = scmp.le.s32.totalorder 1, %s14
      %p117 = scmp.lt.s32.totalorder %s14, 3
      %p118 = pnand %p116, %p117
      %p119 = pneg %p118
      // Predicated region
      $region9: #{tpu_custom_call.1} parent=5 // pred_check
        _
      $region10: #{tpu_custom_call.1} parent=5 // pred_check_branch
        %121 = sbr.rel (%p118) target = $region12
      $region11: #{tpu_custom_call.1} parent=5 // pred_region
        %s122 = ssub.s32 %s14, 1
        // Predicated region
        $region13: #{tpu_custom_call.1} parent=11 // pred_check
          %p123 = pneg %p80
        $region14: #{tpu_custom_call.1} parent=11 // pred_check_branch
          %125 = sbr.rel (%p123) target = $region16
        $region15: #{tpu_custom_call.1} parent=11 // pred_region
          %p126 = scmp.lt.s32.totalorder %s23, 0
          %s127 = scalar_select %p126, %s23, 0
          %s128 = smul.addr %s127, 4
          %s129 = scalar_lea.vmem %s1, %s128
        $region16: #{tpu_custom_call.1} parent=11 // pred_fallthru
          _
      $region12: #{tpu_custom_call.1} parent=5 // pred_fallthru
        _
      %p130 = scmp.lt.s32.totalorder %s14, 2
      // Predicated region
      $region17: #{tpu_custom_call.1} parent=5 // pred_check
        %p131 = pneg %p130
      $region18: #{tpu_custom_call.1} parent=5 // pred_check_branch
        %133 = sbr.rel (%p131) target = $region20
      $region19: #{tpu_custom_call.1} parent=5 // pred_region
        // Predicated region
        $region21: #{tpu_custom_call.1} parent=19 // pred_check
          %p134 = pneg %p48
        $region22: #{tpu_custom_call.1} parent=19 // pred_check_branch
          %136 = sbr.rel (%p134) target = $region24
        $region23: #{tpu_custom_call.1} parent=19 // pred_region
          %s137 = sand.u32 %s38, 1
          %s138 = scalar_lea.sflag [#allocation3], %s137
          %s139 = sand.u32 %s38, 1
          %s140 = smul.addr %s139, 4
          %s141 = scalar_lea.vmem [#allocation2], %s140
          %143 = vsyncadd %s138, 0
          %s144 = sadd.s32 %s21, %s22
          %s145 = smul.addr %s144, 4
          %s146 = scalar_lea.hbm %s0, %s145
          %s148 = sshll.u32 %s146, 4
          %s149 = int_to_ptr.hbm [resolvable:$true] %s148
          %s150 = sshll.u32 %s141, 4
          %s151 = int_to_ptr.vmem [resolvable:$true] %s150
          %153 = dma.hbm_to_vmem [thread:$0]  %s149, 64, %s151, %s138
        $region24: #{tpu_custom_call.1} parent=19 // pred_fallthru
          _
      $region20: #{tpu_custom_call.1} parent=5 // pred_fallthru
        _
      %p154 = scmp.le.s32.totalorder 1, %s14
      %p155 = scmp.lt.s32.totalorder %s14, 3
      %p156 = pnand %p154, %p155
      %p157 = pneg %p156
      // Predicated region
      $region25: #{tpu_custom_call.1} parent=5 // pred_check
        _
      $region26: #{tpu_custom_call.1} parent=5 // pred_check_branch
        %159 = sbr.rel (%p156) target = $region28
      $region27: #{tpu_custom_call.1} parent=5 // pred_region
        %s160 = ssub.s32 %s14, 1
        %s161 = sand.u32 %s41, 1
        %s162 = scalar_lea.sflag [#allocation3], %s161
        %s163 = sand.u32 %s41, 1
        %s164 = smul.addr %s163, 4
        %s165 = scalar_lea.vmem [#allocation2], %s164
        // Predicated region
        $region29: #{tpu_custom_call.1} parent=27 // pred_check
          %p166 = pneg %p54
        $region30: #{tpu_custom_call.1} parent=27 // pred_check_branch
          %168 = sbr.rel (%p166) target = $region32
        $region31: #{tpu_custom_call.1} parent=27 // pred_region
          %170 = dma.done %s162, 64
        $region32: #{tpu_custom_call.1} parent=27 // pred_fallthru
          _
        %s171 = sand.u32 %s41, 1
        %s172 = scalar_lea.sflag [#allocation3], %s171
        %s173 = sand.u32 %s41, 1
        %s174 = smul.addr %s173, 4
        %s175 = scalar_lea.vmem [#allocation2], %s174
        %p176 = pneg %p54
        %p177 = pneg %p51
        %p178 = scmp.lt.s32.totalorder %s23, 0
        %s179 = scalar_select %p178, %s23, 0
        %s180 = smul.addr %s179, 4
        %s181 = scalar_lea.vmem %s1, %s180
        %p182 = pneg %p80
        %p183 = pneg %p77
        %p184 = pneg %p108
        %p185 = pneg %p105
        %s186 = sand.u32 %s95, 1
        %s187 = scalar_lea.sflag [#allocation4], %s186
        %s188 = sand.u32 %s95, 1
        %s189 = smul.addr %s188, 4
        %s190 = scalar_lea.vmem [#allocation5], %s189
        %p191 = scmp.lt.s32.totalorder %s23, 0
        %s192 = scalar_select %p191, %s23, 0
        %s193 = smul.addr %s192, 4
        %s194 = scalar_lea.vmem %s1, %s193
        %v195 = vld [vmem:[%s165] sm:$0xf]
        %v196 = vld [vmem:[%s194] sm:$0xf]
        %v197 = vadd.f32 %v195, %v196
        %198 = vst [vmem:[%s190] sm:$0xf] %v197
        %s199 = sand.u32 %s95, 1
        %s200 = scalar_lea.sflag [#allocation4], %s199
        %s201 = sand.u32 %s95, 1
        %s202 = smul.addr %s201, 4
        %s203 = scalar_lea.vmem [#allocation5], %s202
        // Predicated region
        $region33: #{tpu_custom_call.1} parent=27 // pred_check
          %p204 = pneg %p105
        $region34: #{tpu_custom_call.1} parent=27 // pred_check_branch
          %206 = sbr.rel (%p204) target = $region36
        $region35: #{tpu_custom_call.1} parent=27 // pred_region
          %208 = vsyncadd %s200, 0
          %s209 = sadd.s32 %s23, %s24
          %s210 = smul.addr %s209, 4
          %s211 = scalar_lea.hbm %s2, %s210
          %s213 = sshll.u32 %s203, 4
          %s214 = int_to_ptr.vmem [resolvable:$true] %s213
          %s215 = sshll.u32 %s211, 4
          %s216 = int_to_ptr.hbm [resolvable:$true] %s215
          %218 = dma.vmem_to_hbm [thread:$0]  %s214, 64, %s216, %s200
        $region36: #{tpu_custom_call.1} parent=27 // pred_fallthru
          _
      $region28: #{tpu_custom_call.1} parent=5 // pred_fallthru
        _
      %p219 = scmp.le.s32.totalorder 2, %s14
      // Predicated region
      $region37: #{tpu_custom_call.1} parent=5 // pred_check
        %p220 = pneg %p219
      $region38: #{tpu_custom_call.1} parent=5 // pred_check_branch
        %222 = sbr.rel (%p220) target = $region40
      $region39: #{tpu_custom_call.1} parent=5 // pred_region
        %s223 = ssub.s32 %s14, 2
        // Predicated region
        $region41: #{tpu_custom_call.1} parent=39 // pred_check
          %p224 = pneg %p111
        $region42: #{tpu_custom_call.1} parent=39 // pred_check_branch
          %226 = sbr.rel (%p224) target = $region44
        $region43: #{tpu_custom_call.1} parent=39 // pred_region
          %s227 = sand.u32 %s96, 1
          %s228 = scalar_lea.sflag [#allocation4], %s227
          %s229 = sand.u32 %s96, 1
          %s230 = smul.addr %s229, 4
          %s231 = scalar_lea.vmem [#allocation5], %s230
          %233 = dma.done %s228, 64
        $region44: #{tpu_custom_call.1} parent=39 // pred_fallthru
          _
      $region40: #{tpu_custom_call.1} parent=5 // pred_fallthru
        _
    $region6: #{tpu_custom_call.1} parent=1 // loop_footer
      %s18 = sadd.s32 1, %s14
    $region7: #{tpu_custom_call.1} parent=1 // loop_footer_branch
      %13 = sbr.rel target = $region3
    $region8: #{tpu_custom_call.1} parent=1 // loop_exit
      _
    %234 = vsyncpa [#allocation3], 1
    %s235 = scalar_lea.sflag [#allocation3], 1
    %236 = vsyncpa %s235, 1
    %237 = vsyncpa [#allocation4], 1
    %s238 = scalar_lea.sflag [#allocation4], 1
    %239 = vsyncpa %s238, 1

</llo_original>
